<compile_context>
chip_gen: v7x
topology: tpu7x:2x2x1
jax: 0.10.0
libtpu: 0.0.40
codegen_flags: <defaults>
</compile_context>

<pallas_src>
import jax
import jax.numpy as jnp
from jax.experimental import pallas as pl
from jax.experimental.pallas import tpu as pltpu

M_REAL = 0.7
M_FAKE = 0.0
ALPHA = 20.0
EPS = 1e-12

LANE = 128
SUBLANE = 8
MAX_TILE_B = 512  # batch rows per grid step (upper bound; VMEM-budgeted below)


def _round_up(x, m):
    return ((x + m - 1) // m) * m


def _softplus(z):
    # numerically stable softplus, same semantics as torch.nn.Softplus()
    return jnp.maximum(z, 0.0) + jnp.log1p(jnp.exp(-jnp.abs(z)))


def _pad2(x, rows, cols):
    r, c = x.shape
    if r == rows and c == cols:
        return x
    return jnp.pad(x, ((0, rows - r), (0, cols - c)))


def samo_loss_kernel(feats_ref, w_ref, side_ref, out_ref):
    # --- L2-normalize the feats tile (rsqrt + mul; EUP slot, no divide) -------------------
    feats = feats_ref[...].astype(jnp.float32)                      # [TB, Dp]
    ssq = jnp.sum(feats * feats, axis=-1, keepdims=True)            # [TB, 1]
    inv_norm = jax.lax.rsqrt(jnp.maximum(ssq, EPS * EPS))           # == 1/max(||x||, EPS)
    f_norm = feats * inv_norm                                       # [TB, Dp]

    # --- pre-normalized, pre-gathered attractor rows (wrapper-side gather) ----------------
    w = w_ref[...].astype(jnp.float32)                              # [TB, Dp]
    score = jnp.sum(f_norm * w, axis=-1, keepdims=True)             # [TB, 1] cosine sim

    # --- margin + stable softplus, coefficients precomputed in the wrapper ----------------
    side = side_ref[...].astype(jnp.float32)                        # [TB, 3]
    coeff = side[:, 0:1]                                            # alpha * sign
    bias = side[:, 1:2]                                             # alpha * sign * margin
    weight = side[:, 2:3]                                           # valid_mask / B
    z = bias - coeff * score
    per_sample = weight * _softplus(z)                              # [TB, 1]

    # per-tile partial sum (mean already folded into `weight`)
    out_ref[0] = jnp.sum(per_sample, keepdims=True)                 # (1,1) view of (1,1,1) block


def _pallas_samo_loss(feats_p, w_p, side_p, tile_b):
    b_pad, d_pad = feats_p.shape
    num_tiles = b_pad // tile_b

    flops = 5 * b_pad * d_pad + 8 * b_pad
    bytes_accessed = (feats_p.size * feats_p.dtype.itemsize
                      + w_p.size * w_p.dtype.itemsize
                      + side_p.size * 4 + num_tiles * 4)
    cost = pl.CostEstimate(flops=flops,
                           transcendentals=3 * b_pad,
                           bytes_accessed=bytes_accessed)

    partials = pl.pallas_call(
        samo_loss_kernel,
        out_shape=jax.ShapeDtypeStruct((num_tiles, 1, 1), jnp.float32),
        grid=(num_tiles,),
        in_specs=[
            pl.BlockSpec((tile_b, d_pad), lambda i: (i, 0)),   # feats tile (streamed)
            pl.BlockSpec((tile_b, d_pad), lambda i: (i, 0)),   # gathered attractors (streamed)
            pl.BlockSpec((tile_b, 3), lambda i: (i, 0)),       # coeff / bias / weight
        ],
        out_specs=pl.BlockSpec((1, 1, 1), lambda i: (i, 0, 0)),
        compiler_params=pltpu.CompilerParams(
            dimension_semantics=("parallel",),                 # megacore-shardable (v7x: 2 TCs)
            vmem_limit_bytes=32 * 1024 * 1024),                # explicit, v7x(64 MiB)-safe
        cost_estimate=cost,
    )(feats_p, w_p, side_p)
    return jnp.sum(partials)                                   # tiny final reduction in JAX


class LossFunctionWrapper:
    """JAX analogue of samo.search_lr.LossFunctionWrapper (SAMO, spoofprint=1 path).

    # TODO(synk): the generic `loss_func` callable of the PyTorch wrapper is hard-coded to the
    # SAMO speaker-attractor (spoofprint=1) loss; other loss_func choices are not translated.
    """

    def __init__(self, centers, *, max_tile_b=MAX_TILE_B):
        centers = jnp.asarray(centers, jnp.float32)
        self.centers = centers                          # the 'enroll' argument
        self._d = centers.shape[1]
        self._max_tile_b = max_tile_b
        # Hoisted (per-call-constant) L2 normalization of the attractor table.
        inv = jax.lax.rsqrt(jnp.maximum(
            jnp.sum(centers * centers, axis=-1, keepdims=True), EPS * EPS))
        self._c_norm = centers * inv                    # [N_spk, D] f32

    def __call__(self, inputs, labels):
        feats, spk = inputs
        b, d = feats.shape
        assert d == self._d, "feature dim mismatch with centers"
        d_pad = _round_up(d, LANE)

        # VMEM-budgeted batch tile: keep double-buffered feats+w streams under ~16 MiB.
        budget = 16 * 1024 * 1024
        max_rows = max(SUBLANE, (budget // (4 * 4 * d_pad)) // SUBLANE * SUBLANE)
        tile_b = min(self._max_tile_b, _round_up(b, SUBLANE), max_rows)
        b_pad = _round_up(b, tile_b)

        # Wrapper-side gather of pre-normalized attractors (replaces the one-hot MXU pass).
        spk = spk.astype(jnp.int32)
        w = jnp.take(self._c_norm, spk, axis=0)                          # [B, D] f32

        # Per-sample sign/margin/mask folded into one small side input:
        #   z_i = bias_i - coeff_i * score_i ;  loss = sum_i weight_i * softplus(z_i)
        labels = labels.astype(jnp.int32)
        sign = jnp.where(labels == 1, 1.0, -1.0).astype(jnp.float32)
        margin = jnp.where(labels == 1, M_REAL, M_FAKE).astype(jnp.float32)
        side = jnp.stack([ALPHA * sign,
                          ALPHA * sign * margin,
                          jnp.full((b,), 1.0 / b, jnp.float32)], axis=-1)  # [B, 3]

        # Pad only when needed (ragged tail or D not lane-aligned); padded rows have weight 0.
        feats_p = _pad2(feats, b_pad, d_pad)
        w_p = _pad2(w, b_pad, d_pad)
        side_p = _pad2(side, b_pad, 3)

        return _pallas_samo_loss(feats_p, w_p, side_p, tile_b)


if __name__ == "__main__":
    B, D, N_SPK = 8, 32, 4

    key = jax.random.PRNGKey(0)
    k_feat, k_cent, k_spk, k_lab = jax.random.split(key, 4)

    feats = jax.random.normal(k_feat, (B, D), dtype=jnp.float32)
    centers = jax.random.normal(k_cent, (N_SPK, D), dtype=jnp.float32)  # deterministic "enroll"
    spk = jax.random.randint(k_spk, (B,), 0, N_SPK, dtype=jnp.int32)
    labels = jax.random.randint(k_lab, (B,), 0, 2, dtype=jnp.int32)     # 1=bonafide, 0=spoof

    wrapper = LossFunctionWrapper(centers)
    loss = wrapper((feats, spk), labels)
    jax.block_until_ready(loss)

    # pure-JAX reference (same math, torch F.normalize semantics)
    def ref_loss(feats, centers, spk, labels):
        fn = feats / jnp.maximum(jnp.linalg.norm(feats, axis=-1, keepdims=True), EPS)
        cn = centers / jnp.maximum(jnp.linalg.norm(centers, axis=-1, keepdims=True), EPS)
        score = jnp.sum(fn * cn[spk], axis=-1)
        z = jnp.where(labels == 1, ALPHA * (M_REAL - score), ALPHA * (score - M_FAKE))
        return jnp.mean(jax.nn.softplus(z))

    ref = ref_loss(feats, centers, spk, labels)
    assert loss.shape == () and bool(jnp.isfinite(loss))
    assert jnp.allclose(loss, ref, atol=1e-3, rtol=1e-3), (float(loss), float(ref))
    print("KERNEL_OK")
</pallas_src>

<mosaic_0001>
module attributes {stable_mosaic.version = 11 : i64} {
  func.func @samo_loss_kernel(%arg0: i32, %arg1: memref<8x128xf32, #tpu.memory_space<vmem>>, %arg2: memref<8x128xf32, #tpu.memory_space<vmem>>, %arg3: memref<8x3xf32, #tpu.memory_space<vmem>>, %arg4: memref<1x1x1xf32, #tpu.memory_space<vmem>>) attributes {dimension_semantics = [#tpu.dimension_semantics<parallel>], iteration_bounds = array<i64: 1>, scalar_prefetch = 0 : i64, scratch_operands = 0 : i64, tpu.core_type = #tpu.core_type<tc>, window_params = [{transform_indices = @transform_0, window_bounds = array<i64: 8, 128>}, {transform_indices = @transform_1, window_bounds = array<i64: 8, 128>}, {transform_indices = @transform_2, window_bounds = array<i64: 8, 3>}, {transform_indices = @transform_3, window_bounds = array<i64: 1, 1, 1>}]} {
    %c0 = arith.constant 0 : index
    %c0_0 = arith.constant 0 : index
    %0 = vector.load %arg1[%c0, %c0_0] : memref<8x128xf32, #tpu.memory_space<vmem>>, vector<8x128xf32>
    %1 = arith.mulf %0, %0 : vector<8x128xf32>
    %cst = arith.constant dense<0.000000e+00> : vector<8xf32>
    %2 = vector.multi_reduction <add>, %1, %cst [1] : vector<8x128xf32> to vector<8xf32>
    %3 = vector.shape_cast %2 : vector<8xf32> to vector<8x1xf32>
    %cst_1 = arith.constant 1.000000e-24 : f32
    %4 = vector.broadcast %cst_1 : f32 to vector<8x1xf32>
    %5 = arith.maximumf %3, %4 : vector<8x1xf32>
    %6 = math.rsqrt %5 : vector<8x1xf32>
    %7 = vector.broadcast %6 : vector<8x1xf32> to vector<8x128xf32>
    %8 = arith.mulf %0, %7 : vector<8x128xf32>
    %c0_2 = arith.constant 0 : index
    %c0_3 = arith.constant 0 : index
    %9 = vector.load %arg2[%c0_2, %c0_3] : memref<8x128xf32, #tpu.memory_space<vmem>>, vector<8x128xf32>
    %10 = arith.mulf %8, %9 : vector<8x128xf32>
    %cst_4 = arith.constant dense<0.000000e+00> : vector<8xf32>
    %11 = vector.multi_reduction <add>, %10, %cst_4 [1] : vector<8x128xf32> to vector<8xf32>
    %12 = vector.shape_cast %11 : vector<8xf32> to vector<8x1xf32>
    %c0_5 = arith.constant 0 : index
    %c0_6 = arith.constant 0 : index
    %13 = vector.load %arg3[%c0_5, %c0_6] : memref<8x3xf32, #tpu.memory_space<vmem>>, vector<8x3xf32>
    %14 = vector.extract_strided_slice %13 {offsets = [0, 0], sizes = [8, 1], strides = [1, 1]} : vector<8x3xf32> to vector<8x1xf32>
    %15 = vector.extract_strided_slice %13 {offsets = [0, 1], sizes = [8, 1], strides = [1, 1]} : vector<8x3xf32> to vector<8x1xf32>
    %16 = vector.extract_strided_slice %13 {offsets = [0, 2], sizes = [8, 1], strides = [1, 1]} : vector<8x3xf32> to vector<8x1xf32>
    %17 = arith.mulf %14, %12 : vector<8x1xf32>
    %18 = arith.subf %15, %17 : vector<8x1xf32>
    %cst_7 = arith.constant 0.000000e+00 : f32
    %19 = vector.broadcast %cst_7 : f32 to vector<8x1xf32>
    %20 = arith.maximumf %18, %19 : vector<8x1xf32>
    %21 = math.absf %18 : vector<8x1xf32>
    %cst_8 = arith.constant 0.000000e+00 : f32
    %22 = vector.broadcast %cst_8 : f32 to vector<8x1xf32>
    %23 = arith.subf %22, %21 : vector<8x1xf32>
    %24 = math.exp %23 : vector<8x1xf32>
    %25 = math.log1p %24 : vector<8x1xf32>
    %26 = arith.addf %20, %25 : vector<8x1xf32>
    %27 = arith.mulf %16, %26 : vector<8x1xf32>
    %28 = vector.shape_cast %27 : vector<8x1xf32> to vector<1x8x1xf32>
    %cst_9 = arith.constant dense<0.000000e+00> : vector<1xf32>
    %29 = vector.multi_reduction <add>, %28, %cst_9 [1, 2] : vector<1x8x1xf32> to vector<1xf32>
    %30 = vector.shape_cast %29 : vector<1xf32> to vector<1x1x1xf32>
    %31 = vector.extract %30[0, 0, 0] : f32 from vector<1x1x1xf32>
    %32 = vector.broadcast %31 : f32 to vector<1x1xf32>
    %c0_10 = arith.constant 0 : index
    %c0_11 = arith.constant 0 : index
    %c0_12 = arith.constant 0 : index
    %33 = vector.load %arg4[%c0_10, %c0_11, %c0_12] : memref<1x1x1xf32, #tpu.memory_space<vmem>>, vector<1x1x1xf32>
    %34 = vector.shape_cast %33 : vector<1x1x1xf32> to vector<1x1xf32>
    %35 = vector.shape_cast %32 : vector<1x1xf32> to vector<1x1x1xf32>
    tpu.vector_store %arg4[%c0_10, %c0_11, %c0_12], %35 {strides = array<i32>} : memref<1x1x1xf32, #tpu.memory_space<vmem>>, vector<1x1x1xf32>,
    return
  }
  func.func @transform_0(%arg0: i32) -> (i32, i32) {
    %c0_i32 = arith.constant 0 : i32
    %c0_i32_0 = arith.constant 0 : i32
    return %arg0, %c0_i32 : i32, i32
  }
  func.func @transform_1(%arg0: i32) -> (i32, i32) {
    %c0_i32 = arith.constant 0 : i32
    %c0_i32_0 = arith.constant 0 : i32
    return %arg0, %c0_i32 : i32, i32
  }
  func.func @transform_2(%arg0: i32) -> (i32, i32) {
    %c0_i32 = arith.constant 0 : i32
    %c0_i32_0 = arith.constant 0 : i32
    return %arg0, %c0_i32 : i32, i32
  }
  func.func @transform_3(%arg0: i32) -> (i32, i32, i32) {
    %c0_i32 = arith.constant 0 : i32
    %c0_i32_0 = arith.constant 0 : i32
    %c0_i32_1 = arith.constant 0 : i32
    return %arg0, %c0_i32, %c0_i32_0 : i32, i32, i32
  }
}

</mosaic_0001>

<llo_original>
// kernel: tpu_custom_call.1
$region0: #{tpu_custom_call.1}
  #allocation0 [shape = 'u32[]', space=smem, size = 0x4, offset = 0x4, fixed_abs, tag = 'smem constant byte address 0x4 - core index']
  #allocation1 [shape = 'u32[144,128]{1,0:T(1,128)}', space=vmem, size = 0x12000, scoped, tag = 'internal scratch']
  %s0 = inlined_call_operand.vmem [shape: f32[8,128], index: 0, kind: input, shape index: {}]
  %s1 = inlined_call_operand.hbm [shape: f32[8,128], index: 1, kind: input, shape index: {}]
  %s2 = inlined_call_operand.vmem [shape: f32[8,3], index: 2, kind: input, shape index: {}]
  %s3 = inlined_call_operand.hbm [shape: f32[1,1,1], index: 3, kind: output, shape index: {}]
  %s4 = sld [smem:[#allocation0]]
  $region26: #{tpu_custom_call.1} parent=0
    _
  %s6 = ssub.s32 1, %s4
  %s7 = scalar_select 0, %s6, %s4
  $region1: #{tpu_custom_call.1} parent=0
    #allocation2 [shape = 'u8[4096]{0}', space=vmem, size = 0x1000, scoped, tag = 'input window, operand 1, single buffered']
    #allocation3 [shape = 's32[1]{0}', space=sflag, size = 0x4, scoped, tag = 'scoped memory for tpu_custom_call.1']
    #allocation4 [shape = 's32[1]{0}', space=sflag, size = 0x4, scoped, tag = 'scoped memory for tpu_custom_call.1']
    #allocation5 [shape = 'u8[512]{0}', space=vmem, size = 0x400, scoped, tag = 'output window, operand 0, single buffered']
    %8 = vsyncpa [#allocation3], 0
    %9 = vsyncpa [#allocation4], 0
    // Predicated region
    $region2: #{tpu_custom_call.1} parent=1 // pred_check
      _
    $region3: #{tpu_custom_call.1} parent=1 // pred_check_branch
      %11 = sbr.rel (0) target = $region5
    $region4: #{tpu_custom_call.1} parent=1 // pred_region
      _
    $region5: #{tpu_custom_call.1} parent=1 // pred_fallthru
      _
    // Predicated region
    $region6: #{tpu_custom_call.1} parent=1 // pred_check
      _
    $region7: #{tpu_custom_call.1} parent=1 // pred_check_branch
      %13 = sbr.rel (0) target = $region9
    $region8: #{tpu_custom_call.1} parent=1 // pred_region
      %s15 = ssub.s32 128, 128
      %16 = vsyncadd [#allocation3], %s15
      %s18 = sshll.u32 [#allocation2], 4
      %s19 = int_to_ptr.vmem [resolvable:$true] %s18
      %21 = dma.hbm_to_vmem [thread:$0]  %s1, 128, %s19, [#allocation3]
    $region9: #{tpu_custom_call.1} parent=1 // pred_fallthru
      _
    // Predicated region
    $region10: #{tpu_custom_call.1} parent=1 // pred_check
      _
    $region11: #{tpu_custom_call.1} parent=1 // pred_check_branch
      %23 = sbr.rel (0) target = $region13
    $region12: #{tpu_custom_call.1} parent=1 // pred_region
      _
    $region13: #{tpu_custom_call.1} parent=1 // pred_fallthru
      _
    // Predicated region
    $region14: #{tpu_custom_call.1} parent=1 // pred_check
      _
    $region15: #{tpu_custom_call.1} parent=1 // pred_check_branch
      %25 = sbr.rel (0) target = $region17
    $region16: #{tpu_custom_call.1} parent=1 // pred_region
      %26 = dma.done [#allocation3], 128
    $region17: #{tpu_custom_call.1} parent=1 // pred_fallthru
      _
    %v27 = vld [vmem:[%s0] sm:$0xff]
    %v28 = vmul.f32 %v27, %v27
    %29 = vadd.xlane.f32.xlu0 %v28
    %v30 = vpop.xlane.xlu0 %29
    %v31 = vmax.f32 %v30, 1e-24
    %v32 = vrsqrt.pop %v31
    %v33 = vmul.f32 %v27, %v32
    %v34 = vld [vmem:[#allocation2] sm:$0xff]
    %v35 = vmul.f32 %v33, %v34
    %36 = vadd.xlane.f32.xlu0 %v35
    %v37 = vpop.xlane.xlu0 %36
    %v38 = vld [vmem:[%s2] sm:$0xff]
    %v39 = vmul.f32 %v38, %v37
    %41 = vrot.lane.b32.xlu0 %v39, 1
    %v42 = vpop.permute.xlu0 %41
    %v44 = vsub.f32 %v38, %v42
    %v45 = vmax.f32 %v44, 0.0
    %v46 = vand.u32 2147483647, %v44
    %v47 = vsub.f32 0.0, %v46
    %v48 = vmul.f32 %v47, 1.442695
    %v49 = vpow.pop %v48
    %v50 = vadd.f32 %v49, 1.0
    %v51 = vlog2.pop %v50
    %v52 = vmul.f32 %v51, 0.6931472
    %v53 = vmul.f32 -0.5, %v49
    %v54 = vadd.f32 %v53, 1.0
    %v55 = vmul.f32 %v54, %v49
    %v56 = vand.u32 2147483647, %v49
    %vm57 = vcmp.lt.f32.partialorder %v56, 0.0004427343
    %v58 = vsel %vm57, %v55, %v52
    %v59 = vadd.f32 %v45, %v58
    %61 = vrot.lane.b32.xlu0 %v59, 1
    %v62 = vpop.permute.xlu0 %61
    %v64 = vmul.f32 %v38, %v62
    %66 = vrot.lane.b32.xlu0 %v64, 126
    %v67 = vpop.permute.xlu0 %66
    %vm69 = vcmask 7168
    %v70 = vsel %vm69, %v67, 0.0
    %71 = vadd.xlane.f32.xlu0 %v70
    %v72 = vpop.xlane.xlu0 %71
    %v73 = vrot.slane %v72, 4
    %v74 = vadd.f32 %v72, %v73
    %v75 = vrot.slane %v74, 2
    %v76 = vadd.f32 %v74, %v75
    %v77 = vrot.slane %v76, 1
    %v78 = vadd.f32 %v76, %v77
    %s79 = vtos %v78
    %v80 = vstv %s79
    %vm81 = vcmask 0
    %82 = vst.msk [vmem:[#allocation5] sm:$0x1] %vm81, %v80
    // Predicated region
    $region18: #{tpu_custom_call.1} parent=1 // pred_check
      _
    $region19: #{tpu_custom_call.1} parent=1 // pred_check_branch
      %84 = sbr.rel (0) target = $region21
    $region20: #{tpu_custom_call.1} parent=1 // pred_region
      %s86 = ssub.s32 16, 16
      %87 = vsyncadd [#allocation4], %s86
      %s89 = sshll.u32 [#allocation5], 4
      %s90 = int_to_ptr.vmem [resolvable:$true] %s89
      %92 = dma.vmem_to_hbm [thread:$0]  %s90, 16, %s3, [#allocation4]
    $region21: #{tpu_custom_call.1} parent=1 // pred_fallthru
      _
    // Predicated region
    $region22: #{tpu_custom_call.1} parent=1 // pred_check
      _
    $region23: #{tpu_custom_call.1} parent=1 // pred_check_branch
      %94 = sbr.rel (0) target = $region25
    $region24: #{tpu_custom_call.1} parent=1 // pred_region
      %95 = dma.done [#allocation4], 16
    $region25: #{tpu_custom_call.1} parent=1 // pred_fallthru
      _
    %96 = vsyncpa [#allocation3], 1
    %97 = vsyncpa [#allocation4], 1

</llo_original>
